<compile_context>
chip_gen: v7x
topology: tpu7x:2x2x1
jax: 0.10.0
libtpu: 0.0.40
codegen_flags: <defaults>
</compile_context>

<pallas_src>
import functools

import jax
import jax.numpy as jnp
from jax import lax
from jax.experimental import pallas as pl
from jax.experimental.pallas import tpu as pltpu


# ---------------------------------------------------------------------------
# Padding / tiling helpers
# ---------------------------------------------------------------------------
def _round_up(x, m):
    return ((x + m - 1) // m) * m


_MAX_TILE = 1024  # fits comfortably in 64 MiB VMEM (v7x) and below


def _pad_and_tile(n):
    """Pad n to a 128-multiple and pick a lane-dense tile.

    The tile is halved (down to 128) when the padded size would otherwise give
    a single-tile grid, so the "parallel" grid axes actually span both
    TensorCores on v7x (a no-op on single-TC v5e/v6e).
    """
    n128 = _round_up(max(n, 1), 128)
    tile = min(_MAX_TILE, n128)
    if n128 > 128 and n128 // tile < 2:
        tile = max(128, _round_up(tile // 2, 128))
    n_pad = _round_up(n128, tile)
    return n_pad, tile


def _dst_row_tile(dst_num, n, tile, n_pad):
    """Row tile / padded row count for the dst_num-row restricted similarity."""
    dst_eff = max(1, min(int(dst_num), int(n)))
    dst128 = _round_up(dst_eff, 128)
    tm = min(tile, dst128)
    dst_pad = _round_up(dst128, tm)
    if dst_pad > n_pad:            # keep the i-row-blocks of fn_bf in range
        tm = 128
        dst_pad = dst128
    return dst_pad, tm


def _vmem_cap_bytes():
    # Generation-aware ceiling: never request more than physical VMEM per TC
    # (64 MiB on v7x, 128 MiB on v5e/v6e); leave headroom for Mosaic scratch.
    try:
        phys = pltpu.get_tpu_info().vmem_capacity_bytes
    except Exception:  # conservative default that is safe on every generation
        phys = 64 * 1024 * 1024
    return int(min(100 * 1024 * 1024, phys - 8 * 1024 * 1024))


def _pad2d(x, rows, cols, dtype):
    r, c = x.shape
    out = jnp.zeros((rows, cols), dtype=dtype)
    return out.at[:r, :c].set(x.astype(dtype))


def _cparams(semantics, step_bytes):
    # Explicit VMEM limit: scoped defaults (16 MiB v5e / 32 MiB v6e,v7x) are far
    # below physical; budget = per-step tiles x double-buffering + headroom,
    # capped below the chip's physical VMEM.
    limit = int(min(max(step_bytes * 4, 32 * 1024 * 1024), _vmem_cap_bytes()))
    return pltpu.CompilerParams(dimension_semantics=semantics,
                                vmem_limit_bytes=limit)


# ---------------------------------------------------------------------------
# Kernel 1: Linear + PReLU + L2 row-normalize (row-tiled over nodes).
# W^T / bias / alpha are small and stay VMEM-resident across the grid
# (index_map -> (0, 0)).  Matmul in bf16, accumulation + epilogue in f32.
# ---------------------------------------------------------------------------
def _transform_norm_kernel(x_ref, wt_ref, b_ref, a_ref, fn_ref, fnb_ref):
    h = jnp.dot(x_ref[...], wt_ref[...], preferred_element_type=jnp.float32)
    h = h + b_ref[...]
    h = jnp.where(h >= 0, h, a_ref[...] * h)            # PReLU, per-channel alpha
    # Dropout: identity in eval mode.
    norm = jnp.sqrt(jnp.sum(h * h, axis=1, keepdims=True))
    inv = 1.0 / jnp.maximum(norm, 1e-12)                 # F.normalize eps-on-norm
    fn = h * inv
    fn_ref[...] = fn
    fnb_ref[...] = fn.astype(jnp.bfloat16)               # cheap bf16 copy for sim


def _transform_and_normalize(feat_bf, wt_bf, b, alpha, *, tm):
    n_pad, d_pad = feat_bf.shape
    step_bytes = (tm * d_pad * 2 + d_pad * d_pad * 2 + 2 * d_pad * 4
                  + tm * d_pad * 4 + tm * d_pad * 2)
    cost = pl.CostEstimate(
        flops=2 * n_pad * d_pad * d_pad + 6 * n_pad * d_pad,
        transcendentals=2 * n_pad,
        bytes_accessed=n_pad * d_pad * 2 + d_pad * d_pad * 2 + n_pad * d_pad * 6)
    # TODO(synk): for very large feat_dim the resident (d_pad, d_pad) weight
    # block needs a K-tiling grid axis; here it is assumed to fit VMEM.
    return pl.pallas_call(
        _transform_norm_kernel,
        out_shape=(jax.ShapeDtypeStruct((n_pad, d_pad), jnp.float32),
                   jax.ShapeDtypeStruct((n_pad, d_pad), jnp.bfloat16)),
        grid_spec=pltpu.PrefetchScalarGridSpec(
            num_scalar_prefetch=0,
            grid=(n_pad // tm,),
            in_specs=[
                pl.BlockSpec((tm, d_pad), lambda i: (i, 0)),
                pl.BlockSpec((d_pad, d_pad), lambda i: (0, 0)),
                pl.BlockSpec((1, d_pad), lambda i: (0, 0)),
                pl.BlockSpec((1, d_pad), lambda i: (0, 0)),
            ],
            out_specs=(pl.BlockSpec((tm, d_pad), lambda i: (i, 0)),
                       pl.BlockSpec((tm, d_pad), lambda i: (i, 0))),
        ),
        compiler_params=_cparams(("parallel",), step_bytes),
        cost_estimate=cost,
    )(feat_bf, wt_bf, b, alpha)


# ---------------------------------------------------------------------------
# Kernel 2: restricted pairwise similarity sim[i, j] = <fn[i], fn[j]> for
# i < dst_pad only (sim is only ever gathered at edge positions whose row is
# < dst_num).  (i, j)-tiled; bf16 operands, f32 accumulation; the contraction
# dim (D padded to 128) fits in one block so there is no reduction grid axis.
# Both operands alias the same fn_bf array; the i-operand's index_map simply
# walks only the first dst_pad rows, so no slice copy is materialized.
# ---------------------------------------------------------------------------
def _pairwise_sim_kernel(fa_ref, fb_ref, sim_ref):
    sim_ref[...] = lax.dot_general(
        fa_ref[...], fb_ref[...],
        dimension_numbers=(((1,), (1,)), ((), ())),
        preferred_element_type=jnp.float32)


def _pairwise_similarity(fn_bf, *, m_pad, tm, tn):
    n_pad, d_pad = fn_bf.shape
    step_bytes = (tm + tn) * d_pad * 2 + tm * tn * 4
    cost = pl.CostEstimate(
        flops=2 * m_pad * n_pad * d_pad,
        transcendentals=0,
        bytes_accessed=(m_pad + n_pad) * d_pad * 2 + m_pad * n_pad * 4)
    return pl.pallas_call(
        _pairwise_sim_kernel,
        out_shape=jax.ShapeDtypeStruct((m_pad, n_pad), jnp.float32),
        grid_spec=pltpu.PrefetchScalarGridSpec(
            num_scalar_prefetch=0,
            grid=(m_pad // tm, n_pad // tn),
            in_specs=[
                pl.BlockSpec((tm, d_pad), lambda i, j: (i, 0)),
                pl.BlockSpec((tn, d_pad), lambda i, j: (j, 0)),
            ],
            out_specs=pl.BlockSpec((tm, tn), lambda i, j: (i, j)),
        ),
        compiler_params=_cparams(("parallel", "parallel"), step_bytes),
        cost_estimate=cost,
    )(fn_bf, fn_bf)


# ---------------------------------------------------------------------------
# Kernel 3: new_adj[i, j] = adj[i, j] / (deg[j] + 1e-6)
# (faithful to torch's `adj / (degrees + 1e-6)` broadcasting: COLUMN j is
#  divided by the row-sum of row j).  deg is computed incrementally outside
#  (O(N+E), no second full pass); the kernel is a pure HBM-bandwidth-bound
#  tiled multiply with the (1, N) degree row always resident.  Reciprocal is
#  exact (only `tile` divides per step).  Output aliases the input.
# ---------------------------------------------------------------------------
def _degree_norm_kernel(adj_ref, deg_ref, out_ref):
    inv = 1.0 / (deg_ref[...] + 1e-6)
    out_ref[...] = adj_ref[...] * inv


def _degree_normalize(adj_pad, deg_row, *, tile):
    n_pad = adj_pad.shape[0]
    step_bytes = 2 * tile * tile * 4 + tile * 4
    cost = pl.CostEstimate(
        flops=2 * n_pad * n_pad,
        transcendentals=n_pad,
        bytes_accessed=2 * n_pad * n_pad * 4 + n_pad * 4)
    return pl.pallas_call(
        _degree_norm_kernel,
        out_shape=jax.ShapeDtypeStruct((n_pad, n_pad), jnp.float32),
        grid_spec=pltpu.PrefetchScalarGridSpec(
            num_scalar_prefetch=0,
            grid=(n_pad // tile, n_pad // tile),
            in_specs=[
                pl.BlockSpec((tile, tile), lambda i, j: (i, j)),
                pl.BlockSpec((1, tile), lambda i, j: (0, j)),
            ],
            out_specs=pl.BlockSpec((tile, tile), lambda i, j: (i, j)),
        ),
        compiler_params=_cparams(("parallel", "parallel"), step_bytes),
        cost_estimate=cost,
        input_output_aliases={0: 0},     # same shape/dtype: write back in place
    )(adj_pad, deg_row)


# ---------------------------------------------------------------------------
# Jitted core: padding, the three Pallas kernels and all fixed-shape edge
# bookkeeping stay on device; only two scalars ever reach the host.
# ---------------------------------------------------------------------------
@functools.partial(
    jax.jit,
    static_argnames=("dst_num", "topk_rate", "n_pad", "d_pad",
                     "tile", "dst_pad", "tile_dst"))
def _denoise_core(adj, feat, w_t, b, alpha, *, dst_num, topk_rate,
                  n_pad, d_pad, tile, dst_pad, tile_dst):
    n, _ = feat.shape

    # --- pad to lane-dense, tile-divisible shapes (zeros are inert) ---------
    feat_bf = _pad2d(feat, n_pad, d_pad, jnp.bfloat16)
    wt_bf = _pad2d(w_t, d_pad, d_pad, jnp.bfloat16)
    b_p = _pad2d(b.reshape(1, -1), 1, d_pad, jnp.float32)
    a_p = _pad2d(alpha.reshape(1, -1), 1, d_pad, jnp.float32)
    adj_pad = _pad2d(adj, n_pad, n_pad, jnp.float32)

    # --- Pallas: transform_feat + L2 normalize ------------------------------
    fn32, fn_bf = _transform_and_normalize(feat_bf, wt_bf, b_p, a_p, tm=tile)

    # --- Pallas: similarity restricted to the first dst_pad rows ------------
    sim_mat = _pairwise_similarity(fn_bf, m_pad=dst_pad, tm=tile_dst, tn=tile)

    # --- on-device edge bookkeeping with fixed-size padded edge list --------
    max_edges = dst_num * n
    src = adj[:dst_num]
    rows, cols = jnp.nonzero(src, size=max_edges, fill_value=0)
    rows = rows.astype(jnp.int32)
    cols = cols.astype(jnp.int32)
    num_edges = jnp.count_nonzero(src).astype(jnp.int32)
    valid = jnp.arange(max_edges, dtype=jnp.int32) < num_edges

    sim_e = (sim_mat[rows, cols] + 1.0) * 0.5
    sort_key = jnp.where(valid, sim_e, jnp.inf)          # padded edges sort last
    order = jnp.argsort(sort_key).astype(jnp.int32)

    n_drop = jnp.floor(num_edges.astype(jnp.float32)
                       * (1.0 - topk_rate)).astype(jnp.int32)
    drop_sorted = jnp.arange(max_edges, dtype=jnp.int32) < n_drop
    drop_flag = jnp.zeros((max_edges,), jnp.bool_).at[order].set(drop_sorted)
    drop_valid = drop_flag & valid
    keep_mult = jnp.where(drop_valid, 0.0, 1.0).astype(jnp.float32)

    # masked scatter: dropped edges -> 0, padded / kept edges untouched
    adj2_pad = adj_pad.at[rows, cols].multiply(keep_mult)

    # incremental degree update (O(N + E); no second full pass over adjacency):
    #   deg_after[i] = rowsum(adj)[i] - sum of dropped edge values in row i
    edge_vals = adj[rows, cols]
    deg0 = jnp.zeros((n_pad,), jnp.float32).at[:n].set(jnp.sum(adj, axis=1))
    deg_drop = jnp.zeros((n_pad,), jnp.float32).at[rows].add(
        jnp.where(drop_valid, edge_vals, 0.0))
    deg_row = (deg0 - deg_drop).reshape(1, n_pad)

    # --- Pallas: column-wise degree normalization ---------------------------
    # TODO(synk): the edge-drop scatter could be fused into this kernel via
    # scalar-prefetched (rows, cols, keep) lists to save one more N^2 pass.
    new_adj_pad = _degree_normalize(adj2_pad, deg_row, tile=tile)

    return new_adj_pad, fn32, sim_e, rows, cols, order, num_edges, n_drop


# ---------------------------------------------------------------------------
# Public forward pass
# ---------------------------------------------------------------------------
def denoise_pool_v2_forward(adj, feat, dst_num, params, denoise_topK_rate=0.5):
    w_t, b, alpha = params
    n, d = feat.shape
    n_pad, tile = _pad_and_tile(n)
    d_pad = _round_up(d, 128)
    dst_pad, tile_dst = _dst_row_tile(dst_num, n, tile, n_pad)

    (new_adj_pad, fn32, sim_e, rows, cols, order,
     num_edges, n_drop) = _denoise_core(
        adj, feat, w_t, b, alpha,
        dst_num=int(dst_num), topk_rate=float(denoise_topK_rate),
        n_pad=n_pad, d_pad=d_pad, tile=tile,
        dst_pad=dst_pad, tile_dst=tile_dst)

    # TODO(synk): the module's return values (pair_list, sim_arr, left_row)
    # have data-dependent lengths, so one host readback of two scalars is
    # unavoidable to materialize them with exact shapes.
    n_edges, nd = (int(v) for v in jax.device_get((num_edges, n_drop)))
    after_cnt = n_edges - nd      # every dropped edge removes exactly one nonzero

    new_adj = new_adj_pad if n == n_pad else new_adj_pad[:n, :n]
    new_feat = fn32 if (n == n_pad and d == d_pad) else fn32[:n, :d]
    pair_list = jnp.stack([rows[:n_edges], cols[:n_edges]], axis=1)
    sim_arr = sim_e[:n_edges]
    left_row = order[nd:n_edges]
    before_edge_num = n_edges / dst_num
    after_edge_num = after_cnt / dst_num

    return (new_adj, new_feat, sim_arr, pair_list,
            before_edge_num, after_edge_num, left_row)


# ---------------------------------------------------------------------------
if __name__ == "__main__":
    key = jax.random.PRNGKey(0)
    N, D, dst_num = 16, 32, 8

    k1, k2, k3, k4 = jax.random.split(key, 4)
    feat = jax.random.normal(k1, (N, D), dtype=jnp.float32)

    # sparse-ish binary adjacency; guarantee every row has at least one edge
    adj = (jax.random.uniform(k2, (N, N)) < 0.3).astype(jnp.float32)
    adj = adj.at[jnp.arange(N), (jnp.arange(N) + 1) % N].set(1.0)

    # transform_feat parameters: Linear(D, D) + PReLU(D); deterministic init
    bound = 1.0 / (D ** 0.5)
    W = jax.random.uniform(k3, (D, D), minval=-bound, maxval=bound,
                           dtype=jnp.float32)          # torch Linear weight (out, in)
    b = jax.random.uniform(k4, (1, D), minval=-bound, maxval=bound,
                           dtype=jnp.float32)
    alpha = jnp.full((1, D), 0.25, dtype=jnp.float32)  # PReLU default init
    params = (W.T, b, alpha)                           # pass W^T for x @ W^T

    out = denoise_pool_v2_forward(adj, feat, dst_num, params,
                                  denoise_topK_rate=0.5)
    jax.block_until_ready(out[0])   # new_adj
    jax.block_until_ready(out[1])   # new_feat
    jax.block_until_ready(out[2])   # sim_arr
    print("KERNEL_OK")
</pallas_src>

<mosaic_0001>
module attributes {stable_mosaic.version = 11 : i64} {
  func.func private @main(%arg0: i32) attributes {dimension_semantics = [#tpu.dimension_semantics<core_parallel>], iteration_bounds = array<i64: 2>, tpu.core_type = #tpu.core_type<sc_scalar_subcore>, window_params = []} {
    return
  }
}

module attributes {stable_mosaic.version = 11 : i64} {
  func.func private @main(%arg0: i32) attributes {dimension_semantics = [#tpu.dimension_semantics<core_parallel>], iteration_bounds = array<i64: 2>, tpu.core_type = #tpu.core_type<sc_scalar_subcore>, window_params = []} {
    return
  }
}

module attributes {stable_mosaic.version = 11 : i64} {
  func.func @_transform_norm_kernel(%arg0: i32, %arg1: memref<128x128xbf16, #tpu.memory_space<vmem>>, %arg2: memref<128x128xbf16, #tpu.memory_space<vmem>>, %arg3: memref<1x128xf32, #tpu.memory_space<vmem>>, %arg4: memref<1x128xf32, #tpu.memory_space<vmem>>, %arg5: memref<128x128xf32, #tpu.memory_space<vmem>>, %arg6: memref<128x128xbf16, #tpu.memory_space<vmem>>) attributes {dimension_semantics = [#tpu.dimension_semantics<parallel>], iteration_bounds = array<i64: 1>, scalar_prefetch = 0 : i64, scratch_operands = 0 : i64, tpu.core_type = #tpu.core_type<tc>, window_params = [{transform_indices = @transform_0, window_bounds = array<i64: 128, 128>}, {pipeline_mode = #tpu.pipeline_mode<synchronous>, transform_indices = @transform_1, window_bounds = array<i64: 128, 128>}, {pipeline_mode = #tpu.pipeline_mode<synchronous>, transform_indices = @transform_2, window_bounds = array<i64: 1, 128>}, {pipeline_mode = #tpu.pipeline_mode<synchronous>, transform_indices = @transform_3, window_bounds = array<i64: 1, 128>}, {transform_indices = @transform_4, window_bounds = array<i64: 128, 128>}, {transform_indices = @transform_5, window_bounds = array<i64: 128, 128>}]} {
    %c0 = arith.constant 0 : index
    %c0_0 = arith.constant 0 : index
    %0 = vector.load %arg1[%c0, %c0_0] : memref<128x128xbf16, #tpu.memory_space<vmem>>, vector<128x128xbf16>
    %c0_1 = arith.constant 0 : index
    %c0_2 = arith.constant 0 : index
    %1 = vector.load %arg2[%c0_1, %c0_2] : memref<128x128xbf16, #tpu.memory_space<vmem>>, vector<128x128xbf16>
    %cst = arith.constant dense<0.000000e+00> : vector<128x128xf32>
    %2 = tpu.matmul %0, %1, %cst {dimension_numbers = #tpu.dot_dimension_numbers<[1], [0], [0], [1], [0, 0, 1, 1], [], []>} : vector<128x128xbf16>, vector<128x128xbf16>, vector<128x128xf32> -> vector<128x128xf32>
    %c0_3 = arith.constant 0 : index
    %c0_4 = arith.constant 0 : index
    %3 = vector.load %arg3[%c0_3, %c0_4] : memref<1x128xf32, #tpu.memory_space<vmem>>, vector<1x128xf32>
    %4 = vector.broadcast %3 : vector<1x128xf32> to vector<128x128xf32>
    %5 = arith.addf %2, %4 : vector<128x128xf32>
    %cst_5 = arith.constant 0.000000e+00 : f32
    %6 = vector.broadcast %cst_5 : f32 to vector<128x128xf32>
    %7 = arith.cmpf oge, %5, %6 : vector<128x128xf32>
    %c0_6 = arith.constant 0 : index
    %c0_7 = arith.constant 0 : index
    %8 = vector.load %arg4[%c0_6, %c0_7] : memref<1x128xf32, #tpu.memory_space<vmem>>, vector<1x128xf32>
    %9 = vector.broadcast %8 : vector<1x128xf32> to vector<128x128xf32>
    %10 = arith.mulf %9, %5 : vector<128x128xf32>
    %11 = arith.select %7, %5, %10 : vector<128x128xi1>, vector<128x128xf32>
    %12 = arith.mulf %11, %11 : vector<128x128xf32>
    %cst_8 = arith.constant dense<0.000000e+00> : vector<128xf32>
    %13 = vector.multi_reduction <add>, %12, %cst_8 [1] : vector<128x128xf32> to vector<128xf32>
    %14 = vector.shape_cast %13 : vector<128xf32> to vector<128x1xf32>
    %15 = math.sqrt %14 : vector<128x1xf32>
    %cst_9 = arith.constant 9.99999996E-13 : f32
    %16 = vector.broadcast %cst_9 : f32 to vector<128x1xf32>
    %17 = arith.maximumf %15, %16 : vector<128x1xf32>
    %cst_10 = arith.constant 1.000000e+00 : f32
    %18 = vector.broadcast %cst_10 : f32 to vector<128x1xf32>
    %19 = arith.divf %18, %17 : vector<128x1xf32>
    %20 = vector.broadcast %19 : vector<128x1xf32> to vector<128x128xf32>
    %21 = arith.mulf %11, %20 : vector<128x128xf32>
    %c0_11 = arith.constant 0 : index
    %c0_12 = arith.constant 0 : index
    %22 = vector.load %arg5[%c0_11, %c0_12] : memref<128x128xf32, #tpu.memory_space<vmem>>, vector<128x128xf32>
    tpu.vector_store %arg5[%c0_11, %c0_12], %21 {strides = array<i32>} : memref<128x128xf32, #tpu.memory_space<vmem>>, vector<128x128xf32>,
    %23 = arith.truncf %21 : vector<128x128xf32> to vector<128x128xbf16>
    %c0_13 = arith.constant 0 : index
    %c0_14 = arith.constant 0 : index
    %24 = vector.load %arg6[%c0_13, %c0_14] : memref<128x128xbf16, #tpu.memory_space<vmem>>, vector<128x128xbf16>
    tpu.vector_store %arg6[%c0_13, %c0_14], %23 {strides = array<i32>} : memref<128x128xbf16, #tpu.memory_space<vmem>>, vector<128x128xbf16>,
    return
  }
  func.func @transform_0(%arg0: i32) -> (i32, i32) {
    %c0_i32 = arith.constant 0 : i32
    %c0_i32_0 = arith.constant 0 : i32
    return %arg0, %c0_i32 : i32, i32
  }
  func.func @transform_1(%arg0: i32) -> (i32, i32) {
    %c0_i32 = arith.constant 0 : i32
    %c0_i32_0 = arith.constant 0 : i32
    %c0_i32_1 = arith.constant 0 : i32
    return %c0_i32, %c0_i32_0 : i32, i32
  }
  func.func @transform_2(%arg0: i32) -> (i32, i32) {
    %c0_i32 = arith.constant 0 : i32
    %c0_i32_0 = arith.constant 0 : i32
    %c0_i32_1 = arith.constant 0 : i32
    return %c0_i32, %c0_i32_0 : i32, i32
  }
  func.func @transform_3(%arg0: i32) -> (i32, i32) {
    %c0_i32 = arith.constant 0 : i32
    %c0_i32_0 = arith.constant 0 : i32
    %c0_i32_1 = arith.constant 0 : i32
    return %c0_i32, %c0_i32_0 : i32, i32
  }
  func.func @transform_4(%arg0: i32) -> (i32, i32) {
    %c0_i32 = arith.constant 0 : i32
    %c0_i32_0 = arith.constant 0 : i32
    return %arg0, %c0_i32 : i32, i32
  }
  func.func @transform_5(%arg0: i32) -> (i32, i32) {
    %c0_i32 = arith.constant 0 : i32
    %c0_i32_0 = arith.constant 0 : i32
    return %arg0, %c0_i32 : i32, i32
  }
}

module attributes {stable_mosaic.version = 11 : i64} {
  func.func @_pairwise_sim_kernel(%arg0: i32, %arg1: i32, %arg2: memref<128x128xbf16, #tpu.memory_space<vmem>>, %arg3: memref<128x128xbf16, #tpu.memory_space<vmem>>, %arg4: memref<128x128xf32, #tpu.memory_space<vmem>>) attributes {dimension_semantics = [#tpu.dimension_semantics<parallel>, #tpu.dimension_semantics<parallel>], iteration_bounds = array<i64: 1, 1>, scalar_prefetch = 0 : i64, scratch_operands = 0 : i64, tpu.core_type = #tpu.core_type<tc>, window_params = [{transform_indices = @transform_0, window_bounds = array<i64: 128, 128>}, {transform_indices = @transform_1, window_bounds = array<i64: 128, 128>}, {transform_indices = @transform_2, window_bounds = array<i64: 128, 128>}]} {
    %c0 = arith.constant 0 : index
    %c0_0 = arith.constant 0 : index
    %0 = vector.load %arg2[%c0, %c0_0] : memref<128x128xbf16, #tpu.memory_space<vmem>>, vector<128x128xbf16>
    %c0_1 = arith.constant 0 : index
    %c0_2 = arith.constant 0 : index
    %1 = vector.load %arg3[%c0_1, %c0_2] : memref<128x128xbf16, #tpu.memory_space<vmem>>, vector<128x128xbf16>
    %cst = arith.constant dense<0.000000e+00> : vector<128x128xf32>
    %2 = tpu.matmul %0, %1, %cst {dimension_numbers = #tpu.dot_dimension_numbers<[1], [1], [0], [0], [0, 0, 1, 0], [], []>} : vector<128x128xbf16>, vector<128x128xbf16>, vector<128x128xf32> -> vector<128x128xf32>
    %c0_3 = arith.constant 0 : index
    %c0_4 = arith.constant 0 : index
    %3 = vector.load %arg4[%c0_3, %c0_4] : memref<128x128xf32, #tpu.memory_space<vmem>>, vector<128x128xf32>
    tpu.vector_store %arg4[%c0_3, %c0_4], %2 {strides = array<i32>} : memref<128x128xf32, #tpu.memory_space<vmem>>, vector<128x128xf32>,
    return
  }
  func.func @transform_0(%arg0: i32, %arg1: i32) -> (i32, i32) {
    %c0_i32 = arith.constant 0 : i32
    %c0_i32_0 = arith.constant 0 : i32
    return %arg0, %c0_i32 : i32, i32
  }
  func.func @transform_1(%arg0: i32, %arg1: i32) -> (i32, i32) {
    %c0_i32 = arith.constant 0 : i32
    %c0_i32_0 = arith.constant 0 : i32
    return %arg1, %c0_i32 : i32, i32
  }
  func.func @transform_2(%arg0: i32, %arg1: i32) -> (i32, i32) {
    %c0_i32 = arith.constant 0 : i32
    return %arg0, %arg1 : i32, i32
  }
}

module attributes {stable_mosaic.version = 11 : i64} {
  func.func @_degree_norm_kernel(%arg0: i32, %arg1: i32, %arg2: memref<128x128xf32, #tpu.memory_space<vmem>>, %arg3: memref<1x128xf32, #tpu.memory_space<vmem>>, %arg4: memref<128x128xf32, #tpu.memory_space<vmem>>) attributes {dimension_semantics = [#tpu.dimension_semantics<parallel>, #tpu.dimension_semantics<parallel>], iteration_bounds = array<i64: 1, 1>, scalar_prefetch = 0 : i64, scratch_operands = 0 : i64, tpu.core_type = #tpu.core_type<tc>, window_params = [{transform_indices = @transform_0, window_bounds = array<i64: 128, 128>}, {transform_indices = @transform_1, window_bounds = array<i64: 1, 128>}, {transform_indices = @transform_2, window_bounds = array<i64: 128, 128>}]} {
    %c0 = arith.constant 0 : index
    %c0_0 = arith.constant 0 : index
    %0 = vector.load %arg3[%c0, %c0_0] : memref<1x128xf32, #tpu.memory_space<vmem>>, vector<1x128xf32>
    %cst = arith.constant 9.99999997E-7 : f32
    %1 = vector.broadcast %cst : f32 to vector<1x128xf32>
    %2 = arith.addf %0, %1 : vector<1x128xf32>
    %cst_1 = arith.constant 1.000000e+00 : f32
    %3 = vector.broadcast %cst_1 : f32 to vector<1x128xf32>
    %4 = arith.divf %3, %2 : vector<1x128xf32>
    %c0_2 = arith.constant 0 : index
    %c0_3 = arith.constant 0 : index
    %5 = vector.load %arg2[%c0_2, %c0_3] : memref<128x128xf32, #tpu.memory_space<vmem>>, vector<128x128xf32>
    %6 = vector.broadcast %4 : vector<1x128xf32> to vector<128x128xf32>
    %7 = arith.mulf %5, %6 : vector<128x128xf32>
    %c0_4 = arith.constant 0 : index
    %c0_5 = arith.constant 0 : index
    %8 = vector.load %arg4[%c0_4, %c0_5] : memref<128x128xf32, #tpu.memory_space<vmem>>, vector<128x128xf32>
    tpu.vector_store %arg4[%c0_4, %c0_5], %7 {strides = array<i32>} : memref<128x128xf32, #tpu.memory_space<vmem>>, vector<128x128xf32>,
    return
  }
  func.func @transform_0(%arg0: i32, %arg1: i32) -> (i32, i32) {
    %c0_i32 = arith.constant 0 : i32
    return %arg0, %arg1 : i32, i32
  }
  func.func @transform_1(%arg0: i32, %arg1: i32) -> (i32, i32) {
    %c0_i32 = arith.constant 0 : i32
    %c0_i32_0 = arith.constant 0 : i32
    return %c0_i32, %arg1 : i32, i32
  }
  func.func @transform_2(%arg0: i32, %arg1: i32) -> (i32, i32) {
    %c0_i32 = arith.constant 0 : i32
    return %arg0, %arg1 : i32, i32
  }
}

</mosaic_0001>

<llo_original>
// kernel: _denoise_core.4
$region0: #{_denoise_core.4}
  #allocation0 [shape = 'u32[]', space=smem, size = 0x4, offset = 0x4, fixed_abs, tag = 'smem constant byte address 0x4 - core index']
  #allocation1 [shape = 'u32[144,128]{1,0:T(1,128)}', space=vmem, size = 0x12000, scoped, tag = 'internal scratch']
  %s0 = inlined_call_operand.vmem [shape: bf16[128,128], index: 0, kind: input, shape index: {}, may-alias: {0,1}]
  %s1 = inlined_call_operand.vmem [shape: bf16[128,128], index: 1, kind: input, shape index: {}, may-alias: {0,1}]
  %s2 = inlined_call_operand.vmem [shape: f32[128,128], index: 2, kind: output, shape index: {}]
  %s3 = sld [smem:[#allocation0]]
  $region18: #{_denoise_core.4} parent=0
    _
  %s5 = ssub.s32 1, %s3
  %s6 = scalar_select 0, %s5, %s3
  // Predicated region
  $region2: #{_denoise_core.4} parent=0 // pred_check
    _
  $region3: #{_denoise_core.4} parent=0 // pred_check_branch
    %8 = sbr.rel (0) target = $region5
  $region4: #{_denoise_core.4} parent=0 // pred_region
    _
  $region5: #{_denoise_core.4} parent=0 // pred_fallthru
    _
  // Predicated region
  $region6: #{_denoise_core.4} parent=0 // pred_check
    _
  $region7: #{_denoise_core.4} parent=0 // pred_check_branch
    %10 = sbr.rel (0) target = $region9
  $region8: #{_denoise_core.4} parent=0 // pred_region
    _
  $region9: #{_denoise_core.4} parent=0 // pred_fallthru
    _
  %v12 = vld [vmem:[%s0] sm:$0xf]
  %v13 = vld [vmem:[%s0 + $0x4] sm:$0xf]
  %v14 = vld [vmem:[%s0 + $0x8] sm:$0xf]
  %v15 = vld [vmem:[%s0 + $0xc] sm:$0xf]
  %v16 = vld [vmem:[%s0 + $0x10] sm:$0xf]
  %v17 = vld [vmem:[%s0 + $0x14] sm:$0xf]
  %v18 = vld [vmem:[%s0 + $0x18] sm:$0xf]
  %v19 = vld [vmem:[%s0 + $0x1c] sm:$0xf]
  %v20 = vld [vmem:[%s0 + $0x20] sm:$0xf]
  %v21 = vld [vmem:[%s0 + $0x24] sm:$0xf]
  %v22 = vld [vmem:[%s0 + $0x28] sm:$0xf]
  %v23 = vld [vmem:[%s0 + $0x2c] sm:$0xf]
  %v24 = vld [vmem:[%s0 + $0x30] sm:$0xf]
  %v25 = vld [vmem:[%s0 + $0x34] sm:$0xf]
  %v26 = vld [vmem:[%s0 + $0x38] sm:$0xf]
  %v27 = vld [vmem:[%s0 + $0x3c] sm:$0xf]
  %v28 = vld [vmem:[%s1] sm:$0xf]
  %v29 = vld [vmem:[%s1 + $0x4] sm:$0xf]
  %v30 = vld [vmem:[%s1 + $0x8] sm:$0xf]
  %v31 = vld [vmem:[%s1 + $0xc] sm:$0xf]
  %v32 = vld [vmem:[%s1 + $0x10] sm:$0xf]
  %v33 = vld [vmem:[%s1 + $0x14] sm:$0xf]
  %v34 = vld [vmem:[%s1 + $0x18] sm:$0xf]
  %v35 = vld [vmem:[%s1 + $0x1c] sm:$0xf]
  %v36 = vld [vmem:[%s1 + $0x20] sm:$0xf]
  %v37 = vld [vmem:[%s1 + $0x24] sm:$0xf]
  %v38 = vld [vmem:[%s1 + $0x28] sm:$0xf]
  %v39 = vld [vmem:[%s1 + $0x2c] sm:$0xf]
  %v40 = vld [vmem:[%s1 + $0x30] sm:$0xf]
  %v41 = vld [vmem:[%s1 + $0x34] sm:$0xf]
  %v42 = vld [vmem:[%s1 + $0x38] sm:$0xf]
  %v43 = vld [vmem:[%s1 + $0x3c] sm:$0xf]
  %v60 = vunpack.c.l.b16 %v12
  %v61 = vunpack.c.l.b16 %v13
  %v62 = vunpack.c.l.b16 %v14
  %v63 = vunpack.c.l.b16 %v15
  %v64 = vunpack.c.l.b16 %v16
  %v65 = vunpack.c.l.b16 %v17
  %v66 = vunpack.c.l.b16 %v18
  %v67 = vunpack.c.l.b16 %v19
  %v68 = vunpack.c.l.b16 %v20
  %v69 = vunpack.c.l.b16 %v21
  %v70 = vunpack.c.l.b16 %v22
  %v71 = vunpack.c.l.b16 %v23
  %v72 = vunpack.c.l.b16 %v24
  %v73 = vunpack.c.l.b16 %v25
  %v74 = vunpack.c.l.b16 %v26
  %v75 = vunpack.c.l.b16 %v27
  %v76 = vpack.c.b16 %v61, %v60
  %v77 = vpack.c.b16 %v63, %v62
  %v78 = vpack.c.b16 %v65, %v64
  %v79 = vpack.c.b16 %v67, %v66
  %v80 = vpack.c.b16 %v69, %v68
  %v81 = vpack.c.b16 %v71, %v70
  %v82 = vpack.c.b16 %v73, %v72
  %v83 = vpack.c.b16 %v75, %v74
  %v108 = vunpack.c.l.b16 %v28
  %v109 = vunpack.c.l.b16 %v29
  %v110 = vunpack.c.l.b16 %v30
  %v111 = vunpack.c.l.b16 %v31
  %v112 = vunpack.c.l.b16 %v32
  %v113 = vunpack.c.l.b16 %v33
  %v114 = vunpack.c.l.b16 %v34
  %v115 = vunpack.c.l.b16 %v35
  %v116 = vunpack.c.l.b16 %v36
  %v117 = vunpack.c.l.b16 %v37
  %v118 = vunpack.c.l.b16 %v38
  %v119 = vunpack.c.l.b16 %v39
  %v120 = vunpack.c.l.b16 %v40
  %v121 = vunpack.c.l.b16 %v41
  %v122 = vunpack.c.l.b16 %v42
  %v123 = vunpack.c.l.b16 %v43
  %v124 = vpack.c.b16 %v109, %v108
  %v125 = vpack.c.b16 %v111, %v110
  %v126 = vpack.c.b16 %v113, %v112
  %v127 = vpack.c.b16 %v115, %v114
  %v128 = vpack.c.b16 %v117, %v116
  %v129 = vpack.c.b16 %v119, %v118
  %v130 = vpack.c.b16 %v121, %v120
  %v131 = vpack.c.b16 %v123, %v122
  %140 = vmatprep.subr.bf16.mxu0 0
  %141 = vmatpush1.bf16.xpose.msra.mxu0 %v124
  %142 = vmatprep.subr.bf16.mxu0 0
  %143 = vmatpush1.bf16.xpose.msra.mxu0 %v125
  %144 = vmatprep.subr.bf16.mxu0 0
  %145 = vmatpush1.bf16.xpose.msra.mxu0 %v126
  %146 = vmatprep.subr.bf16.mxu0 0
  %147 = vmatpush1.bf16.xpose.msra.mxu0 %v127
  %148 = vmatprep.subr.bf16.mxu0 0
  %149 = vmatpush1.bf16.xpose.msra.mxu0 %v128
  %150 = vmatprep.subr.bf16.mxu0 0
  %151 = vmatpush1.bf16.xpose.msra.mxu0 %v129
  %152 = vmatprep.subr.bf16.mxu0 0
  %153 = vmatpush1.bf16.xpose.msra.mxu0 %v130
  %154 = vmatprep.subr.bf16.mxu0 0
  %155 = vmatpush1.bf16.xpose.msra.mxu0 %v131
  %156 = vmatprep.subr.bf16.mxu0 0
  %157 = vmatpush1.bf16.xpose.msra.mxu0 0
  %158 = vmatprep.subr.bf16.mxu0 0
  %159 = vmatpush1.bf16.xpose.msra.mxu0 0
  %160 = vmatprep.subr.bf16.mxu0 0
  %161 = vmatpush1.bf16.xpose.msra.mxu0 0
  %162 = vmatprep.subr.bf16.mxu0 0
  %163 = vmatpush1.bf16.xpose.msra.mxu0 0
  %164 = vmatprep.subr.bf16.mxu0 0
  %165 = vmatpush1.bf16.xpose.msra.mxu0 0
  %166 = vmatprep.subr.bf16.mxu0 0
  %167 = vmatpush1.bf16.xpose.msra.mxu0 0
  %168 = vmatprep.subr.bf16.mxu0 0
  %169 = vmatpush1.bf16.xpose.msra.mxu0 0
  %170 = vmatprep.subr.bf16.mxu0 0
  %171 = vmatpush1.bf16.xpose.msra.mxu0 0
  %172 = vmatprep.mubr.bf16.mxu0 0
  %173 = vmatmul.mubr.bf16.gmra.mrb[0].mxu0 %v76
  %v174 = vpop.f32.mrb[0].mxu0
  %v175 = vadd.f32 0.0, %v174
  %v176 = vpop.f32.mrb[0].mxu0
  %v177 = vpop.f32.mrb[0].mxu0
  %v178 = vadd.f32 0.0, %v177
  %v179 = vpop.f32.mrb[0].mxu0
  %180 = vmatprep.mubr.bf16.mxu0 0
  %181 = vmatmul.mubr.bf16.gmra.mrb[0].mxu0 %v77
  %v182 = vpop.f32.mrb[0].mxu0
  %v183 = vadd.f32 0.0, %v182
  %v184 = vpop.f32.mrb[0].mxu0
  %v185 = vpop.f32.mrb[0].mxu0
  %v186 = vadd.f32 0.0, %v185
  %v187 = vpop.f32.mrb[0].mxu0
  %188 = vmatprep.mubr.bf16.mxu0 0
  %189 = vmatmul.mubr.bf16.gmra.mrb[0].mxu0 %v78
  %v190 = vpop.f32.mrb[0].mxu0
  %v191 = vadd.f32 0.0, %v190
  %v192 = vpop.f32.mrb[0].mxu0
  %v193 = vpop.f32.mrb[0].mxu0
  %v194 = vadd.f32 0.0, %v193
  %v195 = vpop.f32.mrb[0].mxu0
  %196 = vmatprep.mubr.bf16.mxu0 0
  %197 = vmatmul.mubr.bf16.gmra.mrb[0].mxu0 %v79
  %v198 = vpop.f32.mrb[0].mxu0
  %v199 = vadd.f32 0.0, %v198
  %v200 = vpop.f32.mrb[0].mxu0
  %v201 = vpop.f32.mrb[0].mxu0
  %v202 = vadd.f32 0.0, %v201
  %v203 = vpop.f32.mrb[0].mxu0
  %204 = vmatprep.mubr.bf16.mxu0 0
  %205 = vmatmul.mubr.bf16.gmra.mrb[0].mxu0 %v80
  %v206 = vpop.f32.mrb[0].mxu0
  %v207 = vadd.f32 0.0, %v206
  %v208 = vpop.f32.mrb[0].mxu0
  %v209 = vpop.f32.mrb[0].mxu0
  %v210 = vadd.f32 0.0, %v209
  %v211 = vpop.f32.mrb[0].mxu0
  %212 = vmatprep.mubr.bf16.mxu0 0
  %213 = vmatmul.mubr.bf16.gmra.mrb[0].mxu0 %v81
  %v214 = vpop.f32.mrb[0].mxu0
  %v215 = vadd.f32 0.0, %v214
  %v216 = vpop.f32.mrb[0].mxu0
  %v217 = vpop.f32.mrb[0].mxu0
  %v218 = vadd.f32 0.0, %v217
  %v219 = vpop.f32.mrb[0].mxu0
  %220 = vmatprep.mubr.bf16.mxu0 0
  %221 = vmatmul.mubr.bf16.gmra.mrb[0].mxu0 %v82
  %v222 = vpop.f32.mrb[0].mxu0
  %v223 = vadd.f32 0.0, %v222
  %v224 = vpop.f32.mrb[0].mxu0
  %v225 = vpop.f32.mrb[0].mxu0
  %v226 = vadd.f32 0.0, %v225
  %v227 = vpop.f32.mrb[0].mxu0
  %228 = vmatprep.mubr.bf16.mxu0 0
  %229 = vmatmul.mubr.bf16.gmra.mrb[0].mxu0 %v83
  %v230 = vpop.f32.mrb[0].mxu0
  %v231 = vadd.f32 0.0, %v230
  %v232 = vpop.f32.mrb[0].mxu0
  %v233 = vpop.f32.mrb[0].mxu0
  %v234 = vadd.f32 0.0, %v233
  %v235 = vpop.f32.mrb[0].mxu0
  %236 = vdwg.mxu0
  %237 = vst [vmem:[%s2] sm:$0xff] %v175
  %238 = vst [vmem:[%s2 + $0x8] sm:$0xff] %v178
  %239 = vst [vmem:[%s2 + $0x10] sm:$0xff] %v183
  %240 = vst [vmem:[%s2 + $0x18] sm:$0xff] %v186
  %241 = vst [vmem:[%s2 + $0x20] sm:$0xff] %v191
  %242 = vst [vmem:[%s2 + $0x28] sm:$0xff] %v194
  %243 = vst [vmem:[%s2 + $0x30] sm:$0xff] %v199
  %244 = vst [vmem:[%s2 + $0x38] sm:$0xff] %v202
  %245 = vst [vmem:[%s2 + $0x40] sm:$0xff] %v207
  %246 = vst [vmem:[%s2 + $0x48] sm:$0xff] %v210
  %247 = vst [vmem:[%s2 + $0x50] sm:$0xff] %v215
  %248 = vst [vmem:[%s2 + $0x58] sm:$0xff] %v218
  %249 = vst [vmem:[%s2 + $0x60] sm:$0xff] %v223
  %250 = vst [vmem:[%s2 + $0x68] sm:$0xff] %v226
  %251 = vst [vmem:[%s2 + $0x70] sm:$0xff] %v231
  %252 = vst [vmem:[%s2 + $0x78] sm:$0xff] %v234
  // Predicated region
  $region10: #{_denoise_core.4} parent=0 // pred_check
    _
  $region11: #{_denoise_core.4} parent=0 // pred_check_branch
    %254 = sbr.rel (0) target = $region13
  $region12: #{_denoise_core.4} parent=0 // pred_region
    _
  $region13: #{_denoise_core.4} parent=0 // pred_fallthru
    _
  // Predicated region
  $region14: #{_denoise_core.4} parent=0 // pred_check
    _
  $region15: #{_denoise_core.4} parent=0 // pred_check_branch
    %256 = sbr.rel (0) target = $region17
  $region16: #{_denoise_core.4} parent=0 // pred_region
    _
  $region17: #{_denoise_core.4} parent=0 // pred_fallthru
    _

// kernel: _denoise_core.3
$region0: #{_denoise_core.3}
  #allocation0 [shape = 'u32[]', space=smem, size = 0x4, offset = 0x4, fixed_abs, tag = 'smem constant byte address 0x4 - core index']
  #allocation1 [shape = 'u32[144,128]{1,0:T(1,128)}', space=vmem, size = 0x12000, scoped, tag = 'internal scratch']
  %s0 = inlined_call_operand.vmem [shape: bf16[128,128], index: 0, kind: input, shape index: {}]
  %s1 = inlined_call_operand.vmem [shape: bf16[128,128], index: 1, kind: input, shape index: {}]
  %s2 = inlined_call_operand.vmem [shape: f32[1,128], index: 2, kind: input, shape index: {}]
  %s3 = inlined_call_operand.vmem [shape: f32[1,128], index: 3, kind: input, shape index: {}]
  %s4 = inlined_call_operand.hbm [shape: f32[128,128], index: 4, kind: output, shape index: {0}]
  %s5 = inlined_call_operand.vmem [shape: bf16[128,128], index: 5, kind: output, shape index: {1}]
  %6 = xla_tuple %s4, %s5
  %s7 = sld [smem:[#allocation0]]
  $region34: #{_denoise_core.3} parent=0
    _
  %s9 = ssub.s32 1, %s7
  %s10 = scalar_select 0, %s9, %s7
  $region1: #{_denoise_core.3} parent=0
    #allocation2 [shape = 'u8[65536]{0}', space=vmem, size = 0x10000, scoped, tag = 'output window, operand 0, single buffered']
    #allocation3 [shape = 's32[1]{0}', space=sflag, size = 0x4, scoped, tag = 'scoped memory for _denoise_core.3']
    %11 = vsyncpa [#allocation3], 0
    // Predicated region
    $region2: #{_denoise_core.3} parent=1 // pred_check
      _
    $region3: #{_denoise_core.3} parent=1 // pred_check_branch
      %13 = sbr.rel (0) target = $region5
    $region4: #{_denoise_core.3} parent=1 // pred_region
      _
    $region5: #{_denoise_core.3} parent=1 // pred_fallthru
      _
    // Predicated region
    $region6: #{_denoise_core.3} parent=1 // pred_check
      _
    $region7: #{_denoise_core.3} parent=1 // pred_check_branch
      %15 = sbr.rel (0) target = $region9
    $region8: #{_denoise_core.3} parent=1 // pred_region
      _
    $region9: #{_denoise_core.3} parent=1 // pred_fallthru
      _
    // Predicated region
    $region10: #{_denoise_core.3} parent=1 // pred_check
      _
    $region11: #{_denoise_core.3} parent=1 // pred_check_branch
      %17 = sbr.rel (0) target = $region13
    $region12: #{_denoise_core.3} parent=1 // pred_region
      _
    $region13: #{_denoise_core.3} parent=1 // pred_fallthru
      _
    // Predicated region
    $region14: #{_denoise_core.3} parent=1 // pred_check
      _
    $region15: #{_denoise_core.3} parent=1 // pred_check_branch
      %19 = sbr.rel (0) target = $region17
    $region16: #{_denoise_core.3} parent=1 // pred_region
      _
    $region17: #{_denoise_core.3} parent=1 // pred_fallthru
      _
    %v21 = vld [vmem:[%s0] sm:$0xf]
    %v22 = vld [vmem:[%s0 + $0x4] sm:$0xf]
    %v23 = vld [vmem:[%s0 + $0x8] sm:$0xf]
    %v24 = vld [vmem:[%s0 + $0xc] sm:$0xf]
    %v25 = vld [vmem:[%s0 + $0x10] sm:$0xf]
    %v26 = vld [vmem:[%s0 + $0x14] sm:$0xf]
    %v27 = vld [vmem:[%s0 + $0x18] sm:$0xf]
    %v28 = vld [vmem:[%s0 + $0x1c] sm:$0xf]
    %v29 = vld [vmem:[%s0 + $0x20] sm:$0xf]
    %v30 = vld [vmem:[%s0 + $0x24] sm:$0xf]
    %v31 = vld [vmem:[%s0 + $0x28] sm:$0xf]
    %v32 = vld [vmem:[%s0 + $0x2c] sm:$0xf]
    %v33 = vld [vmem:[%s0 + $0x30] sm:$0xf]
    %v34 = vld [vmem:[%s0 + $0x34] sm:$0xf]
    %v35 = vld [vmem:[%s0 + $0x38] sm:$0xf]
    %v36 = vld [vmem:[%s0 + $0x3c] sm:$0xf]
    %v37 = vld [vmem:[%s1] sm:$0xf]
    %v38 = vld [vmem:[%s1 + $0x4] sm:$0xf]
    %v39 = vld [vmem:[%s1 + $0x8] sm:$0xf]
    %v40 = vld [vmem:[%s1 + $0xc] sm:$0xf]
    %v41 = vld [vmem:[%s1 + $0x10] sm:$0xf]
    %v42 = vld [vmem:[%s1 + $0x14] sm:$0xf]
    %v43 = vld [vmem:[%s1 + $0x18] sm:$0xf]
    %v44 = vld [vmem:[%s1 + $0x1c] sm:$0xf]
    %v45 = vld [vmem:[%s1 + $0x20] sm:$0xf]
    %v46 = vld [vmem:[%s1 + $0x24] sm:$0xf]
    %v47 = vld [vmem:[%s1 + $0x28] sm:$0xf]
    %v48 = vld [vmem:[%s1 + $0x2c] sm:$0xf]
    %v49 = vld [vmem:[%s1 + $0x30] sm:$0xf]
    %v50 = vld [vmem:[%s1 + $0x34] sm:$0xf]
    %v51 = vld [vmem:[%s1 + $0x38] sm:$0xf]
    %v52 = vld [vmem:[%s1 + $0x3c] sm:$0xf]
    %v53 = vld [vmem:[%s2] sm:$0x1]
    %v55 = vlaneseq
    %v56 = vshrl.u32 %v55, 7
    %v57 = vsub.s32 0, %v56
    %v58 = vrot.slane %v53, %v57
    %v76 = vunpack.c.l.b16 %v21
    %v77 = vunpack.c.l.b16 %v22
    %v78 = vunpack.c.l.b16 %v23
    %v79 = vunpack.c.l.b16 %v24
    %v80 = vunpack.c.l.b16 %v25
    %v81 = vunpack.c.l.b16 %v26
    %v82 = vunpack.c.l.b16 %v27
    %v83 = vunpack.c.l.b16 %v28
    %v84 = vunpack.c.l.b16 %v29
    %v85 = vunpack.c.l.b16 %v30
    %v86 = vunpack.c.l.b16 %v31
    %v87 = vunpack.c.l.b16 %v32
    %v88 = vunpack.c.l.b16 %v33
    %v89 = vunpack.c.l.b16 %v34
    %v90 = vunpack.c.l.b16 %v35
    %v91 = vunpack.c.l.b16 %v36
    %v92 = vpack.c.b16 %v77, %v76
    %v93 = vpack.c.b16 %v79, %v78
    %v94 = vpack.c.b16 %v81, %v80
    %v95 = vpack.c.b16 %v83, %v82
    %v96 = vpack.c.b16 %v85, %v84
    %v97 = vpack.c.b16 %v87, %v86
    %v98 = vpack.c.b16 %v89, %v88
    %v99 = vpack.c.b16 %v91, %v90
    %v124 = vunpack.c.l.b16 %v37
    %v125 = vunpack.c.l.b16 %v38
    %v126 = vunpack.c.l.b16 %v39
    %v127 = vunpack.c.l.b16 %v40
    %v128 = vunpack.c.l.b16 %v41
    %v129 = vunpack.c.l.b16 %v42
    %v130 = vunpack.c.l.b16 %v43
    %v131 = vunpack.c.l.b16 %v44
    %v132 = vunpack.c.l.b16 %v45
    %v133 = vunpack.c.l.b16 %v46
    %v134 = vunpack.c.l.b16 %v47
    %v135 = vunpack.c.l.b16 %v48
    %v136 = vunpack.c.l.b16 %v49
    %v137 = vunpack.c.l.b16 %v50
    %v138 = vunpack.c.l.b16 %v51
    %v139 = vunpack.c.l.b16 %v52
    %v140 = vpack.c.b16 %v125, %v124
    %v141 = vpack.c.b16 %v127, %v126
    %v142 = vpack.c.b16 %v129, %v128
    %v143 = vpack.c.b16 %v131, %v130
    %v144 = vpack.c.b16 %v133, %v132
    %v145 = vpack.c.b16 %v135, %v134
    %v146 = vpack.c.b16 %v137, %v136
    %v147 = vpack.c.b16 %v139, %v138
    %156 = vmatprep.subr.bf16.mxu0 0
    %157 = vmatpush1.bf16.msra.mxu0 %v140
    %158 = vmatprep.subr.bf16.mxu0 0
    %159 = vmatpush1.bf16.msra.mxu0 %v141
    %160 = vmatprep.subr.bf16.mxu0 0
    %161 = vmatpush1.bf16.msra.mxu0 %v142
    %162 = vmatprep.subr.bf16.mxu0 0
    %163 = vmatpush1.bf16.msra.mxu0 %v143
    %164 = vmatprep.subr.bf16.mxu0 0
    %165 = vmatpush1.bf16.msra.mxu0 %v144
    %166 = vmatprep.subr.bf16.mxu0 0
    %167 = vmatpush1.bf16.msra.mxu0 %v145
    %168 = vmatprep.subr.bf16.mxu0 0
    %169 = vmatpush1.bf16.msra.mxu0 %v146
    %170 = vmatprep.subr.bf16.mxu0 0
    %171 = vmatpush1.bf16.msra.mxu0 %v147
    %172 = vmatprep.subr.bf16.mxu0 0
    %173 = vmatpush1.bf16.msra.mxu0 0
    %174 = vmatprep.subr.bf16.mxu0 0
    %175 = vmatpush1.bf16.msra.mxu0 0
    %176 = vmatprep.subr.bf16.mxu0 0
    %177 = vmatpush1.bf16.msra.mxu0 0
    %178 = vmatprep.subr.bf16.mxu0 0
    %179 = vmatpush1.bf16.msra.mxu0 0
    %180 = vmatprep.subr.bf16.mxu0 0
    %181 = vmatpush1.bf16.msra.mxu0 0
    %182 = vmatprep.subr.bf16.mxu0 0
    %183 = vmatpush1.bf16.msra.mxu0 0
    %184 = vmatprep.subr.bf16.mxu0 0
    %185 = vmatpush1.bf16.msra.mxu0 0
    %186 = vmatprep.subr.bf16.mxu0 0
    %187 = vmatpush1.bf16.msra.mxu0 0
    %188 = vmatprep.mubr.bf16.mxu0 0
    %189 = vmatmul.mubr.bf16.gmra.mrb[0].mxu0 %v92
    %v190 = vpop.f32.mrb[0].mxu0
    %v191 = vadd.f32 %v58, %v190
    %v192 = vpop.f32.mrb[0].mxu0
    %v193 = vpop.f32.mrb[0].mxu0
    %v194 = vadd.f32 %v58, %v193
    %v195 = vpop.f32.mrb[0].mxu0
    %196 = vmatprep.mubr.bf16.mxu0 0
    %197 = vmatmul.mubr.bf16.gmra.mrb[0].mxu0 %v93
    %v198 = vpop.f32.mrb[0].mxu0
    %v199 = vadd.f32 %v58, %v198
    %v200 = vpop.f32.mrb[0].mxu0
    %v201 = vpop.f32.mrb[0].mxu0
    %v202 = vadd.f32 %v58, %v201
    %v203 = vpop.f32.mrb[0].mxu0
    %204 = vmatprep.mubr.bf16.mxu0 0
    %205 = vmatmul.mubr.bf16.gmra.mrb[0].mxu0 %v94
    %v206 = vpop.f32.mrb[0].mxu0
    %v207 = vadd.f32 %v58, %v206
    %v208 = vpop.f32.mrb[0].mxu0
    %v209 = vpop.f32.mrb[0].mxu0
    %v210 = vadd.f32 %v58, %v209
    %v211 = vpop.f32.mrb[0].mxu0
    %212 = vmatprep.mubr.bf16.mxu0 0
    %213 = vmatmul.mubr.bf16.gmra.mrb[0].mxu0 %v95
    %v214 = vpop.f32.mrb[0].mxu0
    %v215 = vadd.f32 %v58, %v214
    %v216 = vpop.f32.mrb[0].mxu0
    %v217 = vpop.f32.mrb[0].mxu0
    %v218 = vadd.f32 %v58, %v217
    %v219 = vpop.f32.mrb[0].mxu0
    %220 = vmatprep.mubr.bf16.mxu0 0
    %221 = vmatmul.mubr.bf16.gmra.mrb[0].mxu0 %v96
    %v222 = vpop.f32.mrb[0].mxu0
    %v223 = vadd.f32 %v58, %v222
    %v224 = vpop.f32.mrb[0].mxu0
    %v225 = vpop.f32.mrb[0].mxu0
    %v226 = vadd.f32 %v58, %v225
    %v227 = vpop.f32.mrb[0].mxu0
    %228 = vmatprep.mubr.bf16.mxu0 0
    %229 = vmatmul.mubr.bf16.gmra.mrb[0].mxu0 %v97
    %v230 = vpop.f32.mrb[0].mxu0
    %v231 = vadd.f32 %v58, %v230
    %v232 = vpop.f32.mrb[0].mxu0
    %v233 = vpop.f32.mrb[0].mxu0
    %v234 = vadd.f32 %v58, %v233
    %v235 = vpop.f32.mrb[0].mxu0
    %236 = vmatprep.mubr.bf16.mxu0 0
    %237 = vmatmul.mubr.bf16.gmra.mrb[0].mxu0 %v98
    %v238 = vpop.f32.mrb[0].mxu0
    %v239 = vadd.f32 %v58, %v238
    %v240 = vpop.f32.mrb[0].mxu0
    %v241 = vpop.f32.mrb[0].mxu0
    %v242 = vadd.f32 %v58, %v241
    %v243 = vpop.f32.mrb[0].mxu0
    %244 = vmatprep.mubr.bf16.mxu0 0
    %245 = vmatmul.mubr.bf16.gmra.mrb[0].mxu0 %v99
    %v246 = vpop.f32.mrb[0].mxu0
    %v247 = vadd.f32 %v58, %v246
    %v248 = vpop.f32.mrb[0].mxu0
    %v249 = vpop.f32.mrb[0].mxu0
    %v250 = vadd.f32 %v58, %v249
    %v251 = vpop.f32.mrb[0].mxu0
    %252 = vdwg.mxu0
    %vm253 = vcmp.ge.f32.partialorder %v191, 0.0
    %vm254 = vcmp.ge.f32.partialorder %v194, 0.0
    %vm255 = vcmp.ge.f32.partialorder %v199, 0.0
    %vm256 = vcmp.ge.f32.partialorder %v202, 0.0
    %vm257 = vcmp.ge.f32.partialorder %v207, 0.0
    %vm258 = vcmp.ge.f32.partialorder %v210, 0.0
    %vm259 = vcmp.ge.f32.partialorder %v215, 0.0
    %vm260 = vcmp.ge.f32.partialorder %v218, 0.0
    %vm261 = vcmp.ge.f32.partialorder %v223, 0.0
    %vm262 = vcmp.ge.f32.partialorder %v226, 0.0
    %vm263 = vcmp.ge.f32.partialorder %v231, 0.0
    %vm264 = vcmp.ge.f32.partialorder %v234, 0.0
    %vm265 = vcmp.ge.f32.partialorder %v239, 0.0
    %vm266 = vcmp.ge.f32.partialorder %v242, 0.0
    %vm267 = vcmp.ge.f32.partialorder %v247, 0.0
    %vm268 = vcmp.ge.f32.partialorder %v250, 0.0
    %v269 = vld [vmem:[%s3] sm:$0x1]
    %v271 = vlaneseq
    %v272 = vshrl.u32 %v271, 7
    %v273 = vsub.s32 0, %v272
    %v274 = vrot.slane %v269, %v273
    %v276 = vmul.f32 %v274, %v191
    %v277 = vmul.f32 %v274, %v194
    %v278 = vmul.f32 %v274, %v199
    %v279 = vmul.f32 %v274, %v202
    %v280 = vmul.f32 %v274, %v207
    %v281 = vmul.f32 %v274, %v210
    %v282 = vmul.f32 %v274, %v215
    %v283 = vmul.f32 %v274, %v218
    %v284 = vmul.f32 %v274, %v223
    %v285 = vmul.f32 %v274, %v226
    %v286 = vmul.f32 %v274, %v231
    %v287 = vmul.f32 %v274, %v234
    %v288 = vmul.f32 %v274, %v239
    %v289 = vmul.f32 %v274, %v242
    %v290 = vmul.f32 %v274, %v247
    %v291 = vmul.f32 %v274, %v250
    %v292 = vsel %vm253, %v191, %v276
    %v293 = vsel %vm254, %v194, %v277
    %v294 = vsel %vm255, %v199, %v278
    %v295 = vsel %vm256, %v202, %v279
    %v296 = vsel %vm257, %v207, %v280
    %v297 = vsel %vm258, %v210, %v281
    %v298 = vsel %vm259, %v215, %v282
    %v299 = vsel %vm260, %v218, %v283
    %v300 = vsel %vm261, %v223, %v284
    %v301 = vsel %vm262, %v226, %v285
    %v302 = vsel %vm263, %v231, %v286
    %v303 = vsel %vm264, %v234, %v287
    %v304 = vsel %vm265, %v239, %v288
    %v305 = vsel %vm266, %v242, %v289
    %v306 = vsel %vm267, %v247, %v290
    %v307 = vsel %vm268, %v250, %v291
    %v308 = vmul.f32 %v292, %v292
    %v309 = vmul.f32 %v293, %v293
    %v310 = vmul.f32 %v294, %v294
    %v311 = vmul.f32 %v295, %v295
    %v312 = vmul.f32 %v296, %v296
    %v313 = vmul.f32 %v297, %v297
    %v314 = vmul.f32 %v298, %v298
    %v315 = vmul.f32 %v299, %v299
    %v316 = vmul.f32 %v300, %v300
    %v317 = vmul.f32 %v301, %v301
    %v318 = vmul.f32 %v302, %v302
    %v319 = vmul.f32 %v303, %v303
    %v320 = vmul.f32 %v304, %v304
    %v321 = vmul.f32 %v305, %v305
    %v322 = vmul.f32 %v306, %v306
    %v323 = vmul.f32 %v307, %v307
    %324 = vadd.xlane.f32.xlu0 %v308
    %v325 = vpop.xlane.xlu0 %324
    %326 = vadd.xlane.f32.xlu0 %v309
    %v327 = vpop.xlane.xlu0 %326
    %328 = vadd.xlane.f32.xlu0 %v310
    %v329 = vpop.xlane.xlu0 %328
    %330 = vadd.xlane.f32.xlu0 %v311
    %v331 = vpop.xlane.xlu0 %330
    %332 = vadd.xlane.f32.xlu0 %v312
    %v333 = vpop.xlane.xlu0 %332
    %334 = vadd.xlane.f32.xlu0 %v313
    %v335 = vpop.xlane.xlu0 %334
    %336 = vadd.xlane.f32.xlu0 %v314
    %v337 = vpop.xlane.xlu0 %336
    %338 = vadd.xlane.f32.xlu0 %v315
    %v339 = vpop.xlane.xlu0 %338
    %340 = vadd.xlane.f32.xlu0 %v316
    %v341 = vpop.xlane.xlu0 %340
    %342 = vadd.xlane.f32.xlu0 %v317
    %v343 = vpop.xlane.xlu0 %342
    %344 = vadd.xlane.f32.xlu0 %v318
    %v345 = vpop.xlane.xlu0 %344
    %346 = vadd.xlane.f32.xlu0 %v319
    %v347 = vpop.xlane.xlu0 %346
    %348 = vadd.xlane.f32.xlu0 %v320
    %v349 = vpop.xlane.xlu0 %348
    %350 = vadd.xlane.f32.xlu0 %v321
    %v351 = vpop.xlane.xlu0 %350
    %352 = vadd.xlane.f32.xlu0 %v322
    %v353 = vpop.xlane.xlu0 %352
    %354 = vadd.xlane.f32.xlu0 %v323
    %v355 = vpop.xlane.xlu0 %354
    %v356 = vrsqrt.pop %v325
    %v357 = vmul.f32 %v325, %v356
    %vm358 = vcmp.eq.f32.partialorder %v325, inf
    %v359 = vsel %vm358, %v325, %v357
    %vm360 = vcmp.eq.f32.partialorder %v325, 0.0
    %v361 = vand.u32 %v325, 2147483648
    %v362 = vsel %vm360, %v361, %v359
    %v363 = vrsqrt.pop %v327
    %v364 = vmul.f32 %v327, %v363
    %vm365 = vcmp.eq.f32.partialorder %v327, inf
    %v366 = vsel %vm365, %v327, %v364
    %vm367 = vcmp.eq.f32.partialorder %v327, 0.0
    %v368 = vand.u32 %v327, 2147483648
    %v369 = vsel %vm367, %v368, %v366
    %v370 = vrsqrt.pop %v329
    %v371 = vmul.f32 %v329, %v370
    %vm372 = vcmp.eq.f32.partialorder %v329, inf
    %v373 = vsel %vm372, %v329, %v371
    %vm374 = vcmp.eq.f32.partialorder %v329, 0.0
    %v375 = vand.u32 %v329, 2147483648
    %v376 = vsel %vm374, %v375, %v373
    %v377 = vrsqrt.pop %v331
    %v378 = vmul.f32 %v331, %v377
    %vm379 = vcmp.eq.f32.partialorder %v331, inf
    %v380 = vsel %vm379, %v331, %v378
    %vm381 = vcmp.eq.f32.partialorder %v331, 0.0
    %v382 = vand.u32 %v331, 2147483648
    %v383 = vsel %vm381, %v382, %v380
    %v384 = vrsqrt.pop %v333
    %v385 = vmul.f32 %v333, %v384
    %vm386 = vcmp.eq.f32.partialorder %v333, inf
    %v387 = vsel %vm386, %v333, %v385
    %vm388 = vcmp.eq.f32.partialorder %v333, 0.0
    %v389 = vand.u32 %v333, 2147483648
    %v390 = vsel %vm388, %v389, %v387
    %v391 = vrsqrt.pop %v335
    %v392 = vmul.f32 %v335, %v391
    %vm393 = vcmp.eq.f32.partialorder %v335, inf
    %v394 = vsel %vm393, %v335, %v392
    %vm395 = vcmp.eq.f32.partialorder %v335, 0.0
    %v396 = vand.u32 %v335, 2147483648
    %v397 = vsel %vm395, %v396, %v394
    %v398 = vrsqrt.pop %v337
    %v399 = vmul.f32 %v337, %v398
    %vm400 = vcmp.eq.f32.partialorder %v337, inf
    %v401 = vsel %vm400, %v337, %v399
    %vm402 = vcmp.eq.f32.partialorder %v337, 0.0
    %v403 = vand.u32 %v337, 2147483648
    %v404 = vsel %vm402, %v403, %v401
    %v405 = vrsqrt.pop %v339
    %v406 = vmul.f32 %v339, %v405
    %vm407 = vcmp.eq.f32.partialorder %v339, inf
    %v408 = vsel %vm407, %v339, %v406
    %vm409 = vcmp.eq.f32.partialorder %v339, 0.0
    %v410 = vand.u32 %v339, 2147483648
    %v411 = vsel %vm409, %v410, %v408
    %v412 = vrsqrt.pop %v341
    %v413 = vmul.f32 %v341, %v412
    %vm414 = vcmp.eq.f32.partialorder %v341, inf
    %v415 = vsel %vm414, %v341, %v413
    %vm416 = vcmp.eq.f32.partialorder %v341, 0.0
    %v417 = vand.u32 %v341, 2147483648
    %v418 = vsel %vm416, %v417, %v415
    %v419 = vrsqrt.pop %v343
    %v420 = vmul.f32 %v343, %v419
    %vm421 = vcmp.eq.f32.partialorder %v343, inf
    %v422 = vsel %vm421, %v343, %v420
    %vm423 = vcmp.eq.f32.partialorder %v343, 0.0
    %v424 = vand.u32 %v343, 2147483648
    %v425 = vsel %vm423, %v424, %v422
    %v426 = vrsqrt.pop %v345
    %v427 = vmul.f32 %v345, %v426
    %vm428 = vcmp.eq.f32.partialorder %v345, inf
    %v429 = vsel %vm428, %v345, %v427
    %vm430 = vcmp.eq.f32.partialorder %v345, 0.0
    %v431 = vand.u32 %v345, 2147483648
    %v432 = vsel %vm430, %v431, %v429
    %v433 = vrsqrt.pop %v347
    %v434 = vmul.f32 %v347, %v433
    %vm435 = vcmp.eq.f32.partialorder %v347, inf
    %v436 = vsel %vm435, %v347, %v434
    %vm437 = vcmp.eq.f32.partialorder %v347, 0.0
    %v438 = vand.u32 %v347, 2147483648
    %v439 = vsel %vm437, %v438, %v436
    %v440 = vrsqrt.pop %v349
    %v441 = vmul.f32 %v349, %v440
    %vm442 = vcmp.eq.f32.partialorder %v349, inf
    %v443 = vsel %vm442, %v349, %v441
    %vm444 = vcmp.eq.f32.partialorder %v349, 0.0
    %v445 = vand.u32 %v349, 2147483648
    %v446 = vsel %vm444, %v445, %v443
    %v447 = vrsqrt.pop %v351
    %v448 = vmul.f32 %v351, %v447
    %vm449 = vcmp.eq.f32.partialorder %v351, inf
    %v450 = vsel %vm449, %v351, %v448
    %vm451 = vcmp.eq.f32.partialorder %v351, 0.0
    %v452 = vand.u32 %v351, 2147483648
    %v453 = vsel %vm451, %v452, %v450
    %v454 = vrsqrt.pop %v353
    %v455 = vmul.f32 %v353, %v454
    %vm456 = vcmp.eq.f32.partialorder %v353, inf
    %v457 = vsel %vm456, %v353, %v455
    %vm458 = vcmp.eq.f32.partialorder %v353, 0.0
    %v459 = vand.u32 %v353, 2147483648
    %v460 = vsel %vm458, %v459, %v457
    %v461 = vrsqrt.pop %v355
    %v462 = vmul.f32 %v355, %v461
    %vm463 = vcmp.eq.f32.partialorder %v355, inf
    %v464 = vsel %vm463, %v355, %v462
    %vm465 = vcmp.eq.f32.partialorder %v355, 0.0
    %v466 = vand.u32 %v355, 2147483648
    %v467 = vsel %vm465, %v466, %v464
    %v468 = vmax.f32 %v362, 1e-12
    %v469 = vmax.f32 %v369, 1e-12
    %v470 = vmax.f32 %v376, 1e-12
    %v471 = vmax.f32 %v383, 1e-12
    %v472 = vmax.f32 %v390, 1e-12
    %v473 = vmax.f32 %v397, 1e-12
    %v474 = vmax.f32 %v404, 1e-12
    %v475 = vmax.f32 %v411, 1e-12
    %v476 = vmax.f32 %v418, 1e-12
    %v477 = vmax.f32 %v425, 1e-12
    %v478 = vmax.f32 %v432, 1e-12
    %v479 = vmax.f32 %v439, 1e-12
    %v480 = vmax.f32 %v446, 1e-12
    %v481 = vmax.f32 %v453, 1e-12
    %v482 = vmax.f32 %v460, 1e-12
    %v483 = vmax.f32 %v467, 1e-12
    %v484 = vrcp.pop %v468
    %v485 = vmul.f32 1.0, %v484
    %v486 = vrcp.pop %v469
    %v487 = vmul.f32 1.0, %v486
    %v488 = vrcp.pop %v470
    %v489 = vmul.f32 1.0, %v488
    %v490 = vrcp.pop %v471
    %v491 = vmul.f32 1.0, %v490
    %v492 = vrcp.pop %v472
    %v493 = vmul.f32 1.0, %v492
    %v494 = vrcp.pop %v473
    %v495 = vmul.f32 1.0, %v494
    %v496 = vrcp.pop %v474
    %v497 = vmul.f32 1.0, %v496
    %v498 = vrcp.pop %v475
    %v499 = vmul.f32 1.0, %v498
    %v500 = vrcp.pop %v476
    %v501 = vmul.f32 1.0, %v500
    %v502 = vrcp.pop %v477
    %v503 = vmul.f32 1.0, %v502
    %v504 = vrcp.pop %v478
    %v505 = vmul.f32 1.0, %v504
    %v506 = vrcp.pop %v479
    %v507 = vmul.f32 1.0, %v506
    %v508 = vrcp.pop %v480
    %v509 = vmul.f32 1.0, %v508
    %v510 = vrcp.pop %v481
    %v511 = vmul.f32 1.0, %v510
    %v512 = vrcp.pop %v482
    %v513 = vmul.f32 1.0, %v512
    %v514 = vrcp.pop %v483
    %v515 = vmul.f32 1.0, %v514
    %v516 = vmul.f32 %v292, %v485
    %v517 = vmul.f32 %v293, %v487
    %v518 = vmul.f32 %v294, %v489
    %v519 = vmul.f32 %v295, %v491
    %v520 = vmul.f32 %v296, %v493
    %v521 = vmul.f32 %v297, %v495
    %v522 = vmul.f32 %v298, %v497
    %v523 = vmul.f32 %v299, %v499
    %v524 = vmul.f32 %v300, %v501
    %v525 = vmul.f32 %v301, %v503
    %v526 = vmul.f32 %v302, %v505
    %v527 = vmul.f32 %v303, %v507
    %v528 = vmul.f32 %v304, %v509
    %v529 = vmul.f32 %v305, %v511
    %v530 = vmul.f32 %v306, %v513
    %v531 = vmul.f32 %v307, %v515
    %532 = vst [vmem:[#allocation2] sm:$0xff] %v516
    %533 = vst [vmem:[#allocation2 + $0x8] sm:$0xff] %v517
    %534 = vst [vmem:[#allocation2 + $0x10] sm:$0xff] %v518
    %535 = vst [vmem:[#allocation2 + $0x18] sm:$0xff] %v519
    %536 = vst [vmem:[#allocation2 + $0x20] sm:$0xff] %v520
    %537 = vst [vmem:[#allocation2 + $0x28] sm:$0xff] %v521
    %538 = vst [vmem:[#allocation2 + $0x30] sm:$0xff] %v522
    %539 = vst [vmem:[#allocation2 + $0x38] sm:$0xff] %v523
    %540 = vst [vmem:[#allocation2 + $0x40] sm:$0xff] %v524
    %541 = vst [vmem:[#allocation2 + $0x48] sm:$0xff] %v525
    %542 = vst [vmem:[#allocation2 + $0x50] sm:$0xff] %v526
    %543 = vst [vmem:[#allocation2 + $0x58] sm:$0xff] %v527
    %544 = vst [vmem:[#allocation2 + $0x60] sm:$0xff] %v528
    %545 = vst [vmem:[#allocation2 + $0x68] sm:$0xff] %v529
    %546 = vst [vmem:[#allocation2 + $0x70] sm:$0xff] %v530
    %547 = vst [vmem:[#allocation2 + $0x78] sm:$0xff] %v531
    %v548 = vpack.c.bf16 %v517, %v516
    %v549 = vpack.c.bf16 %v519, %v518
    %v550 = vpack.c.bf16 %v521, %v520
    %v551 = vpack.c.bf16 %v523, %v522
    %v552 = vpack.c.bf16 %v525, %v524
    %v553 = vpack.c.bf16 %v527, %v526
    %v554 = vpack.c.bf16 %v529, %v528
    %v555 = vpack.c.bf16 %v531, %v530
    %v564 = vunpack.c.l.b16 %v548
    %v565 = vunpack.c.h.b16 %v548
    %v566 = vunpack.c.l.b16 %v549
    %v567 = vunpack.c.h.b16 %v549
    %v568 = vunpack.c.l.b16 %v550
    %v569 = vunpack.c.h.b16 %v550
    %v570 = vunpack.c.l.b16 %v551
    %v571 = vunpack.c.h.b16 %v551
    %v572 = vunpack.c.l.b16 %v552
    %v573 = vunpack.c.h.b16 %v552
    %v574 = vunpack.c.l.b16 %v553
    %v575 = vunpack.c.h.b16 %v553
    %v576 = vunpack.c.l.b16 %v554
    %v577 = vunpack.c.h.b16 %v554
    %v578 = vunpack.c.l.b16 %v555
    %v579 = vunpack.c.h.b16 %v555
    %v580 = vpack.c.b16 %v564, %v564
    %v581 = vpack.c.b16 %v565, %v565
    %v582 = vpack.c.b16 %v566, %v566
    %v583 = vpack.c.b16 %v567, %v567
    %v584 = vpack.c.b16 %v568, %v568
    %v585 = vpack.c.b16 %v569, %v569
    %v586 = vpack.c.b16 %v570, %v570
    %v587 = vpack.c.b16 %v571, %v571
    %v588 = vpack.c.b16 %v572, %v572
    %v589 = vpack.c.b16 %v573, %v573
    %v590 = vpack.c.b16 %v574, %v574
    %v591 = vpack.c.b16 %v575, %v575
    %v592 = vpack.c.b16 %v576, %v576
    %v593 = vpack.c.b16 %v577, %v577
    %v594 = vpack.c.b16 %v578, %v578
    %v595 = vpack.c.b16 %v579, %v579
    %612 = vst [vmem:[%s5] sm:$0xf] %v580
    %613 = vst [vmem:[%s5 + $0x4] sm:$0xf] %v581
    %614 = vst [vmem:[%s5 + $0x8] sm:$0xf] %v582
    %615 = vst [vmem:[%s5 + $0xc] sm:$0xf] %v583
    %616 = vst [vmem:[%s5 + $0x10] sm:$0xf] %v584
    %617 = vst [vmem:[%s5 + $0x14] sm:$0xf] %v585
    %618 = vst [vmem:[%s5 + $0x18] sm:$0xf] %v586
    %619 = vst [vmem:[%s5 + $0x1c] sm:$0xf] %v587
    %620 = vst [vmem:[%s5 + $0x20] sm:$0xf] %v588
    %621 = vst [vmem:[%s5 + $0x24] sm:$0xf] %v589
    %622 = vst [vmem:[%s5 + $0x28] sm:$0xf] %v590
    %623 = vst [vmem:[%s5 + $0x2c] sm:$0xf] %v591
    %624 = vst [vmem:[%s5 + $0x30] sm:$0xf] %v592
    %625 = vst [vmem:[%s5 + $0x34] sm:$0xf] %v593
    %626 = vst [vmem:[%s5 + $0x38] sm:$0xf] %v594
    %627 = vst [vmem:[%s5 + $0x3c] sm:$0xf] %v595
    // Predicated region
    $region18: #{_denoise_core.3} parent=1 // pred_check
      _
    $region19: #{_denoise_core.3} parent=1 // pred_check_branch
      %629 = sbr.rel (0) target = $region21
    $region20: #{_denoise_core.3} parent=1 // pred_region
      %s631 = ssub.s32 2048, 2048
      %632 = vsyncadd [#allocation3], %s631
      %s633 = sshll.u32 [#allocation2], 4
      %s634 = int_to_ptr.vmem [resolvable:$true] %s633
      %639 = dma.vmem_to_hbm [thread:$0]  %s634, 2048, %s4, [#allocation3], 128, 128, 8
    $region21: #{_denoise_core.3} parent=1 // pred_fallthru
      _
    // Predicated region
    $region22: #{_denoise_core.3} parent=1 // pred_check
      _
    $region23: #{_denoise_core.3} parent=1 // pred_check_branch
      %641 = sbr.rel (0) target = $region25
    $region24: #{_denoise_core.3} parent=1 // pred_region
      _
    $region25: #{_denoise_core.3} parent=1 // pred_fallthru
      _
    // Predicated region
    $region26: #{_denoise_core.3} parent=1 // pred_check
      _
    $region27: #{_denoise_core.3} parent=1 // pred_check_branch
      %643 = sbr.rel (0) target = $region29
    $region28: #{_denoise_core.3} parent=1 // pred_region
      %644 = dma.done [#allocation3], 2048
    $region29: #{_denoise_core.3} parent=1 // pred_fallthru
      _
    // Predicated region
    $region30: #{_denoise_core.3} parent=1 // pred_check
      _
    $region31: #{_denoise_core.3} parent=1 // pred_check_branch
      %646 = sbr.rel (0) target = $region33
    $region32: #{_denoise_core.3} parent=1 // pred_region
      _
    $region33: #{_denoise_core.3} parent=1 // pred_fallthru
      _
    %647 = vsyncpa [#allocation3], 1

// kernel: _denoise_core.5
$region0: #{_denoise_core.5}
  #allocation0 [shape = 'u32[]', space=smem, size = 0x4, offset = 0x4, fixed_abs, tag = 'smem constant byte address 0x4 - core index']
  #allocation1 [shape = 'u32[144,128]{1,0:T(1,128)}', space=vmem, size = 0x12000, scoped, tag = 'internal scratch']
  %s0 = inlined_call_operand.vmem [shape: f32[128,128], index: 0, kind: input, shape index: {}, may-alias: {0,2}]
  %s1 = inlined_call_operand.vmem [shape: f32[1,128], index: 1, kind: input, shape index: {}]
  %s2 = inlined_call_operand.vmem [shape: f32[128,128], index: 2, kind: output, shape index: {}, may-alias: {0,2}]
  %s3 = sld [smem:[#allocation0]]
  $region18: #{_denoise_core.5} parent=0
    _
  %s5 = ssub.s32 1, %s3
  %s6 = scalar_select 0, %s5, %s3
  // Predicated region
  $region2: #{_denoise_core.5} parent=0 // pred_check
    _
  $region3: #{_denoise_core.5} parent=0 // pred_check_branch
    %8 = sbr.rel (0) target = $region5
  $region4: #{_denoise_core.5} parent=0 // pred_region
    _
  $region5: #{_denoise_core.5} parent=0 // pred_fallthru
    _
  // Predicated region
  $region6: #{_denoise_core.5} parent=0 // pred_check
    _
  $region7: #{_denoise_core.5} parent=0 // pred_check_branch
    %10 = sbr.rel (0) target = $region9
  $region8: #{_denoise_core.5} parent=0 // pred_region
    _
  $region9: #{_denoise_core.5} parent=0 // pred_fallthru
    _
  %v11 = vld [vmem:[%s1] sm:$0x1]
  %v12 = vadd.f32 %v11, 1e-06
  %v13 = vrcp.pop %v12
  %v14 = vmul.f32 1.0, %v13
  %v15 = vld [vmem:[%s0] sm:$0xff]
  %v16 = vld [vmem:[%s0 + $0x8] sm:$0xff]
  %v17 = vld [vmem:[%s0 + $0x10] sm:$0xff]
  %v18 = vld [vmem:[%s0 + $0x18] sm:$0xff]
  %v19 = vld [vmem:[%s0 + $0x20] sm:$0xff]
  %v20 = vld [vmem:[%s0 + $0x28] sm:$0xff]
  %v21 = vld [vmem:[%s0 + $0x30] sm:$0xff]
  %v22 = vld [vmem:[%s0 + $0x38] sm:$0xff]
  %v23 = vld [vmem:[%s0 + $0x40] sm:$0xff]
  %v24 = vld [vmem:[%s0 + $0x48] sm:$0xff]
  %v25 = vld [vmem:[%s0 + $0x50] sm:$0xff]
  %v26 = vld [vmem:[%s0 + $0x58] sm:$0xff]
  %v27 = vld [vmem:[%s0 + $0x60] sm:$0xff]
  %v28 = vld [vmem:[%s0 + $0x68] sm:$0xff]
  %v29 = vld [vmem:[%s0 + $0x70] sm:$0xff]
  %v30 = vld [vmem:[%s0 + $0x78] sm:$0xff]
  %v32 = vlaneseq
  %v33 = vshrl.u32 %v32, 7
  %v34 = vsub.s32 0, %v33
  %v35 = vrot.slane %v14, %v34
  %v37 = vmul.f32 %v15, %v35
  %v38 = vmul.f32 %v16, %v35
  %v39 = vmul.f32 %v17, %v35
  %v40 = vmul.f32 %v18, %v35
  %v41 = vmul.f32 %v19, %v35
  %v42 = vmul.f32 %v20, %v35
  %v43 = vmul.f32 %v21, %v35
  %v44 = vmul.f32 %v22, %v35
  %v45 = vmul.f32 %v23, %v35
  %v46 = vmul.f32 %v24, %v35
  %v47 = vmul.f32 %v25, %v35
  %v48 = vmul.f32 %v26, %v35
  %v49 = vmul.f32 %v27, %v35
  %v50 = vmul.f32 %v28, %v35
  %v51 = vmul.f32 %v29, %v35
  %v52 = vmul.f32 %v30, %v35
  %53 = vst [vmem:[%s2] sm:$0xff] %v37
  %54 = vst [vmem:[%s2 + $0x8] sm:$0xff] %v38
  %55 = vst [vmem:[%s2 + $0x10] sm:$0xff] %v39
  %56 = vst [vmem:[%s2 + $0x18] sm:$0xff] %v40
  %57 = vst [vmem:[%s2 + $0x20] sm:$0xff] %v41
  %58 = vst [vmem:[%s2 + $0x28] sm:$0xff] %v42
  %59 = vst [vmem:[%s2 + $0x30] sm:$0xff] %v43
  %60 = vst [vmem:[%s2 + $0x38] sm:$0xff] %v44
  %61 = vst [vmem:[%s2 + $0x40] sm:$0xff] %v45
  %62 = vst [vmem:[%s2 + $0x48] sm:$0xff] %v46
  %63 = vst [vmem:[%s2 + $0x50] sm:$0xff] %v47
  %64 = vst [vmem:[%s2 + $0x58] sm:$0xff] %v48
  %65 = vst [vmem:[%s2 + $0x60] sm:$0xff] %v49
  %66 = vst [vmem:[%s2 + $0x68] sm:$0xff] %v50
  %67 = vst [vmem:[%s2 + $0x70] sm:$0xff] %v51
  %68 = vst [vmem:[%s2 + $0x78] sm:$0xff] %v52
  // Predicated region
  $region10: #{_denoise_core.5} parent=0 // pred_check
    _
  $region11: #{_denoise_core.5} parent=0 // pred_check_branch
    %70 = sbr.rel (0) target = $region13
  $region12: #{_denoise_core.5} parent=0 // pred_region
    _
  $region13: #{_denoise_core.5} parent=0 // pred_fallthru
    _
  // Predicated region
  $region14: #{_denoise_core.5} parent=0 // pred_check
    _
  $region15: #{_denoise_core.5} parent=0 // pred_check_branch
    %72 = sbr.rel (0) target = $region17
  $region16: #{_denoise_core.5} parent=0 // pred_region
    _
  $region17: #{_denoise_core.5} parent=0 // pred_fallthru
    _

</llo_original>
